<compile_context>
chip_gen: v5e
topology: v5e:2x2
jax: 0.10.0
libtpu: 0.0.40
codegen_flags: <defaults>
</compile_context>

<pallas_src>
import math

import jax
import jax.numpy as jnp
from jax import lax
from jax.experimental import pallas as pl
from jax.experimental.pallas import tpu as pltpu


# ---------------------------------------------------------------------------
# helpers
# ---------------------------------------------------------------------------

def _pick_tile(dim, candidates):
    """Largest candidate that evenly divides `dim`, else the full dim."""
    for c in candidates:
        if c <= dim and dim % c == 0:
            return c
    return dim


# ---------------------------------------------------------------------------
# Linear (x @ W + b): bf16 MXU operands, f32 accumulation, K-tiled reduction
# ---------------------------------------------------------------------------

def _linear_kernel(x_ref, w_ref, b_ref, o_ref, acc_ref):
    k = pl.program_id(2)

    @pl.when(k == 0)
    def _():
        acc_ref[...] = jnp.zeros_like(acc_ref)

    acc_ref[...] += jnp.dot(x_ref[...], w_ref[...],
                            preferred_element_type=jnp.float32)

    @pl.when(k == pl.num_programs(2) - 1)
    def _():
        o_ref[...] = (acc_ref[...] + b_ref[...].astype(jnp.float32)
                      ).astype(o_ref.dtype)


def _linear(x2, w, b, out_dtype):
    """x2: (M, K) bf16; w: (K, N) bf16; b: (1, N) f32."""
    M, K = x2.shape
    _, N = w.shape
    tm = _pick_tile(M, (512, 256, 128, 64, 32, 16, 8))
    tn = _pick_tile(N, (512, 256, 128))
    tk = _pick_tile(K, (512, 256, 128))
    grid = (M // tm, N // tn, K // tk)

    return pl.pallas_call(
        _linear_kernel,
        out_shape=jax.ShapeDtypeStruct((M, N), out_dtype),
        grid_spec=pltpu.PrefetchScalarGridSpec(
            num_scalar_prefetch=0,
            grid=grid,
            in_specs=[
                pl.BlockSpec((tm, tk), lambda i, j, k: (i, k)),   # activations
                pl.BlockSpec((tk, tn), lambda i, j, k: (k, j)),   # weights
                pl.BlockSpec((1, tn), lambda i, j, k: (0, j)),    # bias
            ],
            out_specs=pl.BlockSpec((tm, tn), lambda i, j, k: (i, j)),
            scratch_shapes=[pltpu.VMEM((tm, tn), jnp.float32)],
        ),
        compiler_params=pltpu.CompilerParams(
            dimension_semantics=("parallel", "parallel", "arbitrary")),
    )(x2, w, b)


# ---------------------------------------------------------------------------
# Flash-style causal attention, transpose-free, multi-head lane-dense blocks
# ---------------------------------------------------------------------------

def _make_flash_kernel(G, hd, tq, tk):
    assert tq == tk  # diagonal tiles are square -> local iota mask suffices

    def kernel(q_ref, k_ref, v_ref, o_ref, m_sc, l_sc, acc_sc):
        # q_ref/k_ref/v_ref: (tq|tk, G*hd) bf16 windows into the (B*T, 3C)
        # fused qkv buffer (Q already pre-scaled by 1/sqrt(hd)).
        i = pl.program_id(2)   # query-tile index
        j = pl.program_id(3)   # kv-tile index (reduction axis)

        @pl.when(j == 0)
        def _():
            m_sc[...] = jnp.full(m_sc.shape, -jnp.inf, jnp.float32)
            l_sc[...] = jnp.zeros(l_sc.shape, jnp.float32)
            acc_sc[...] = jnp.zeros(acc_sc.shape, jnp.float32)

        def process(masked):
            if masked:
                rows = lax.broadcasted_iota(jnp.int32, (tq, tk), 0)
                cols = lax.broadcasted_iota(jnp.int32, (tq, tk), 1)
                keep = cols <= rows          # i == j on the diagonal tile
            for h in range(G):               # static loop over heads in block
                sl = slice(h * hd, (h + 1) * hd)
                qh = q_ref[:, sl]            # (tq, hd) bf16
                kh = k_ref[:, sl]            # (tk, hd) bf16
                vh = v_ref[:, sl]            # (tk, hd) bf16
                s = lax.dot_general(qh, kh, (((1,), (1,)), ((), ())),
                                    preferred_element_type=jnp.float32)
                if masked:
                    s = jnp.where(keep, s, jnp.float32(-1e10))
                m_prev = m_sc[h]                                   # (tq, 1)
                m_new = jnp.maximum(m_prev,
                                    jnp.max(s, axis=-1, keepdims=True))
                alpha = jnp.exp(m_prev - m_new)                    # (tq, 1)
                p = jnp.exp(s - m_new)                             # (tq, tk)
                l_sc[h] = alpha * l_sc[h] + jnp.sum(p, axis=-1, keepdims=True)
                acc_sc[h] = alpha * acc_sc[h] + jnp.dot(
                    p.astype(jnp.bfloat16), vh,
                    preferred_element_type=jnp.float32)
                m_sc[h] = m_new

        # Strictly-below-diagonal tiles: fully visible, no mask work.
        @pl.when(j < i)
        def _():
            process(masked=False)

        # Diagonal tile: mask, then finalize (tiles j > i are fully masked:
        # no compute here and no new K/V DMA thanks to the clamped index_map).
        @pl.when(j == i)
        def _():
            process(masked=True)
            outs = []
            for h in range(G):
                inv_l = pl.reciprocal(l_sc[h], approx=True)   # EUP
                outs.append(acc_sc[h] * inv_l)
            out = outs[0] if G == 1 else jnp.concatenate(outs, axis=-1)
            o_ref[...] = out.astype(o_ref.dtype)              # lane-dense store

    return kernel


def _flash_attention(qkv, *, B, T, C, n_head):
    """qkv: (B*T, 3C) bf16, columns = [Q | K | V], heads head-major.
    Returns y: (B*T, C) bf16, heads head-major (ready for the out-proj)."""
    hd = C // n_head
    G = math.gcd(max(1, 128 // hd), n_head)   # heads per block
    cw = G * hd                               # column width of each block
    NG = n_head // G                          # number of head groups
    assert cw % 128 == 0, (
        "G*head_dim must be a multiple of 128 for lane-dense blocks; "
        "pad n_embd / choose n_head accordingly")

    tq = _pick_tile(T, (256, 128, 64, 32, 16, 8))
    tk = tq
    nq, nk = T // tq, T // tk

    kernel = _make_flash_kernel(G, hd, tq, tk)

    q_spec = pl.BlockSpec((tq, cw), lambda b, g, i, j: (b * nq + i, g))
    # Clamp the kv row block to min(j, i): for fully-masked tiles (j > i) the
    # index is unchanged from the diagonal step, so Pallas issues NO new DMA.
    k_spec = pl.BlockSpec(
        (tk, cw), lambda b, g, i, j: (b * nk + jnp.minimum(j, i), NG + g))
    v_spec = pl.BlockSpec(
        (tk, cw), lambda b, g, i, j: (b * nk + jnp.minimum(j, i), 2 * NG + g))
    o_spec = pl.BlockSpec((tq, cw), lambda b, g, i, j: (b * nq + i, g))

    return pl.pallas_call(
        kernel,
        out_shape=jax.ShapeDtypeStruct((B * T, C), jnp.bfloat16),
        grid_spec=pltpu.PrefetchScalarGridSpec(
            num_scalar_prefetch=0,
            grid=(B, NG, nq, nk),
            in_specs=[q_spec, k_spec, v_spec],
            out_specs=o_spec,
            scratch_shapes=[
                pltpu.VMEM((G, tq, 1), jnp.float32),    # running max m
                pltpu.VMEM((G, tq, 1), jnp.float32),    # running sum l
                pltpu.VMEM((G, tq, hd), jnp.float32),   # output accumulator
            ],
        ),
        compiler_params=pltpu.CompilerParams(
            # batch / head-group / q-tile parallel (v7x 2-TC sharding);
            # kv-tile is the online-softmax reduction.
            dimension_semantics=("parallel", "parallel", "parallel",
                                 "arbitrary")),
    )(qkv, qkv, qkv)


# ---------------------------------------------------------------------------
# Full forward pass
# ---------------------------------------------------------------------------

def causal_self_attention(x, params, n_head):
    """x: (B, T, C) float32. params: dict of transposed weights & biases."""
    B, T, C = x.shape
    assert C % n_head == 0
    hd = C // n_head
    scale = 1.0 / math.sqrt(hd)

    # Fused QKV weights; attention scale folded into Q columns (free at runtime).
    w_qkv = jnp.concatenate(
        [params['wq'] * scale, params['wk'], params['wv']], axis=1
    ).astype(jnp.bfloat16)                                       # (C, 3C)
    b_qkv = jnp.concatenate(
        [params['bq'] * scale, params['bk'], params['bv']], axis=1
    ).astype(jnp.float32)                                        # (1, 3C)
    wp = params['wp'].astype(jnp.bfloat16)                       # (C, C)
    bp = params['bp'].astype(jnp.float32)                        # (1, C)

    # 1) fused QKV projection (activations cast to bf16 before the DMA).
    x2 = x.reshape(B * T, C).astype(jnp.bfloat16)
    qkv = _linear(x2, w_qkv, b_qkv, out_dtype=jnp.bfloat16)      # (B*T, 3C)

    # 2) flash-style causal attention, reading/writing the flat layouts
    #    directly (no HBM transposes between the three kernels).
    y2 = _flash_attention(qkv, B=B, T=T, C=C, n_head=n_head)     # (B*T, C)

    # 3) output projection.
    out = _linear(y2, wp, bp, out_dtype=x.dtype)                 # (B*T, C)
    return out.reshape(B, T, C)


# ---------------------------------------------------------------------------
# Params / reference / test
# ---------------------------------------------------------------------------

def init_params(key, n_embd):
    """nn.Linear-style init (uniform +/- 1/sqrt(fan_in)); weights stored (in, out)."""
    bound = 1.0 / math.sqrt(n_embd)
    keys = jax.random.split(key, 8)

    def lin(kw, kb):
        w = jax.random.uniform(kw, (n_embd, n_embd), jnp.float32, -bound, bound)
        b = jax.random.uniform(kb, (1, n_embd), jnp.float32, -bound, bound)
        return w, b

    wq, bq = lin(keys[0], keys[1])
    wk, bk = lin(keys[2], keys[3])
    wv, bv = lin(keys[4], keys[5])
    wp, bp = lin(keys[6], keys[7])
    return dict(wq=wq, bq=bq, wk=wk, bk=bk, wv=wv, bv=bv, wp=wp, bp=bp)


def reference(x, params, n_head):
    """Plain-JAX f32 reference of the PyTorch forward (dropout = identity)."""
    B, T, C = x.shape
    hd = C // n_head

    def proj(w, b):
        return x @ w + b[0]

    q = proj(params['wq'], params['bq']).reshape(B, T, n_head, hd).transpose(0, 2, 1, 3)
    k = proj(params['wk'], params['bk']).reshape(B, T, n_head, hd).transpose(0, 2, 1, 3)
    v = proj(params['wv'], params['bv']).reshape(B, T, n_head, hd).transpose(0, 2, 1, 3)
    att = jnp.einsum('bhtd,bhsd->bhts', q, k) / math.sqrt(hd)
    mask = jnp.tril(jnp.ones((T, T), jnp.bool_))
    att = jnp.where(mask[None, None], att, -1e10)
    att = jax.nn.softmax(att, axis=-1)
    y = jnp.einsum('bhts,bhsd->bhtd', att, v).transpose(0, 2, 1, 3).reshape(B, T, C)
    return y @ params['wp'] + params['bp'][0]


if __name__ == "__main__":
    def run_case(B, T, C, n_head):
        key = jax.random.PRNGKey(0)
        kx, kp = jax.random.split(key)
        x = jax.random.normal(kx, (B, T, C), jnp.float32)
        params = init_params(kp, C)
        out = jax.block_until_ready(causal_self_attention(x, params, n_head))
        ref = reference(x, params, n_head)
        assert out.shape == (B, T, C)
        rel = float(jnp.linalg.norm(out - ref) /
                    (jnp.linalg.norm(ref) + 1e-30))
        # bf16 MXU operands + approximate reciprocal -> ~1% relative error.
        assert rel < 3e-2, f"relative error {rel} too large for {(B, T, C, n_head)}"
        return rel

    # Small shapes (single-tile paths): B=2, T=8, C=128, 4 heads.
    run_case(2, 8, 128, 4)
    # Larger shapes exercising multi-tile causal paths (j<i, diag, skipped j>i),
    # multiple head groups, lane-dense grouped blocks, and K-tiled linears.
    run_case(2, 512, 256, 4)

    print("KERNEL_OK")
</pallas_src>

<mosaic_0001>
module attributes {stable_mosaic.version = 11 : i64} {
  func.func @_linear_kernel(%arg0: i32, %arg1: i32, %arg2: i32, %arg3: memref<16x128xbf16, #tpu.memory_space<vmem>>, %arg4: memref<128x128xbf16, #tpu.memory_space<vmem>>, %arg5: memref<1x128xf32, #tpu.memory_space<vmem>>, %arg6: memref<16x128xbf16, #tpu.memory_space<vmem>>, %arg7: memref<16x128xf32, #tpu.memory_space<vmem>>) attributes {dimension_semantics = [#tpu.dimension_semantics<parallel>, #tpu.dimension_semantics<parallel>, #tpu.dimension_semantics<arbitrary>], iteration_bounds = array<i64: 1, 3, 1>, scalar_prefetch = 0 : i64, scratch_operands = 1 : i64, tpu.core_type = #tpu.core_type<tc>, window_params = [{transform_indices = @transform_0, window_bounds = array<i64: 16, 128>}, {transform_indices = @transform_1, window_bounds = array<i64: 128, 128>}, {transform_indices = @transform_2, window_bounds = array<i64: 1, 128>}, {transform_indices = @transform_3, window_bounds = array<i64: 16, 128>}]} {
    %c0_i32 = arith.constant 0 : i32
    %0 = arith.cmpi eq, %arg2, %c0_i32 : i32
    %1 = arith.extui %0 : i1 to i32
    %c0_i32_0 = arith.constant 0 : i32
    %2 = arith.cmpi ne, %1, %c0_i32_0 : i32
    scf.if %2 {
      %cst_10 = arith.constant 0.000000e+00 : f32
      %12 = vector.broadcast %cst_10 : f32 to vector<16x128xf32>
      %c0_11 = arith.constant 0 : index
      %c0_12 = arith.constant 0 : index
      %13 = vector.load %arg7[%c0_11, %c0_12] : memref<16x128xf32, #tpu.memory_space<vmem>>, vector<16x128xf32>
      tpu.vector_store %arg7[%c0_11, %c0_12], %12 {strides = array<i32>} : memref<16x128xf32, #tpu.memory_space<vmem>>, vector<16x128xf32>,
    } else {
    }
    %c0 = arith.constant 0 : index
    %c0_1 = arith.constant 0 : index
    %3 = vector.load %arg7[%c0, %c0_1] : memref<16x128xf32, #tpu.memory_space<vmem>>, vector<16x128xf32>
    %c0_2 = arith.constant 0 : index
    %c0_3 = arith.constant 0 : index
    %4 = vector.load %arg3[%c0_2, %c0_3] : memref<16x128xbf16, #tpu.memory_space<vmem>>, vector<16x128xbf16>
    %c0_4 = arith.constant 0 : index
    %c0_5 = arith.constant 0 : index
    %5 = vector.load %arg4[%c0_4, %c0_5] : memref<128x128xbf16, #tpu.memory_space<vmem>>, vector<128x128xbf16>
    %cst = arith.constant dense<0.000000e+00> : vector<16x128xf32>
    %6 = tpu.matmul %4, %5, %cst {dimension_numbers = #tpu.dot_dimension_numbers<[1], [0], [0], [1], [0, 0, 1, 1], [], []>} : vector<16x128xbf16>, vector<128x128xbf16>, vector<16x128xf32> -> vector<16x128xf32>
    %7 = arith.addf %3, %6 : vector<16x128xf32>
    %c0_6 = arith.constant 0 : index
    %c0_7 = arith.constant 0 : index
    %8 = vector.load %arg7[%c0_6, %c0_7] : memref<16x128xf32, #tpu.memory_space<vmem>>, vector<16x128xf32>
    tpu.vector_store %arg7[%c0_6, %c0_7], %7 {strides = array<i32>} : memref<16x128xf32, #tpu.memory_space<vmem>>, vector<16x128xf32>,
    %c0_i32_8 = arith.constant 0 : i32
    %9 = arith.cmpi eq, %arg2, %c0_i32_8 : i32
    %10 = arith.extui %9 : i1 to i32
    %c0_i32_9 = arith.constant 0 : i32
    %11 = arith.cmpi ne, %10, %c0_i32_9 : i32
    scf.if %11 {
      %c0_10 = arith.constant 0 : index
      %c0_11 = arith.constant 0 : index
      %12 = vector.load %arg7[%c0_10, %c0_11] : memref<16x128xf32, #tpu.memory_space<vmem>>, vector<16x128xf32>
      %c0_12 = arith.constant 0 : index
      %c0_13 = arith.constant 0 : index
      %13 = vector.load %arg5[%c0_12, %c0_13] : memref<1x128xf32, #tpu.memory_space<vmem>>, vector<1x128xf32>
      %14 = vector.broadcast %13 : vector<1x128xf32> to vector<16x128xf32>
      %15 = arith.addf %12, %14 : vector<16x128xf32>
      %16 = arith.truncf %15 : vector<16x128xf32> to vector<16x128xbf16>
      %c0_14 = arith.constant 0 : index
      %c0_15 = arith.constant 0 : index
      %17 = vector.load %arg6[%c0_14, %c0_15] : memref<16x128xbf16, #tpu.memory_space<vmem>>, vector<16x128xbf16>
      tpu.vector_store %arg6[%c0_14, %c0_15], %16 {strides = array<i32>} : memref<16x128xbf16, #tpu.memory_space<vmem>>, vector<16x128xbf16>,
    } else {
    }
    return
  }
  func.func @transform_0(%arg0: i32, %arg1: i32, %arg2: i32) -> (i32, i32) {
    %c0_i32 = arith.constant 0 : i32
    return %arg0, %arg2 : i32, i32
  }
  func.func @transform_1(%arg0: i32, %arg1: i32, %arg2: i32) -> (i32, i32) {
    %c0_i32 = arith.constant 0 : i32
    return %arg2, %arg1 : i32, i32
  }
  func.func @transform_2(%arg0: i32, %arg1: i32, %arg2: i32) -> (i32, i32) {
    %c0_i32 = arith.constant 0 : i32
    %c0_i32_0 = arith.constant 0 : i32
    return %c0_i32, %arg1 : i32, i32
  }
  func.func @transform_3(%arg0: i32, %arg1: i32, %arg2: i32) -> (i32, i32) {
    %c0_i32 = arith.constant 0 : i32
    return %arg0, %arg1 : i32, i32
  }
}

</mosaic_0001>

<llo_original>
// kernel: tpu_custom_call.1
$region0: #{tpu_custom_call.1}
  #allocation0 [shape = 'u32[]', space=smem, size = 0x4, offset = 0x4, fixed_abs, tag = 'smem constant byte address 0x4 - core index']
  #allocation1 [shape = 'u32[72,128]{1,0:T(1,128)}', space=vmem, size = 0x9000, scoped, tag = 'internal scratch']
  #allocation2 [shape = 'f32[16,128]{1,0:T(8,128)}', space=vmem, size = 0x2000, scoped, tag = 'scratch operand']
  %s0 = inlined_call_operand.hbm [shape: bf16[16,128], index: 0, kind: input, shape index: {}]
  %s1 = inlined_call_operand.hbm [shape: bf16[128,384], index: 1, kind: input, shape index: {}]
  %s2 = inlined_call_operand.hbm [shape: f32[1,384], index: 2, kind: input, shape index: {}]
  %s3 = inlined_call_operand.hbm [shape: bf16[16,384], index: 3, kind: output, shape index: {}]
  %s4 = sld [smem:[#allocation0]]
  $region65: #{tpu_custom_call.1} parent=0
    _
  %s6 = ssub.s32 1, %s4
  %s7 = scalar_select 0, %s6, %s4
  $region1: #{tpu_custom_call.1} parent=0
    #allocation3 [shape = 'u8[4096]{0}', space=vmem, size = 0x1000, scoped, tag = 'input window, operand 0, single buffered']
    #allocation4 [shape = 's32[2]{0}', space=sflag, size = 0x8, scoped, tag = 'scoped memory for tpu_custom_call.1']
    #allocation5 [shape = 's32[2]{0}', space=sflag, size = 0x8, scoped, tag = 'scoped memory for tpu_custom_call.1']
    #allocation6 [shape = 'u8[65536]{0}', space=vmem, size = 0x10000, scoped, tag = 'input window, operand 1']
    #allocation7 [shape = 's32[2]{0}', space=sflag, size = 0x8, scoped, tag = 'scoped memory for tpu_custom_call.1']
    #allocation8 [shape = 'u8[1024]{0}', space=vmem, size = 0x400, scoped, tag = 'input window, operand 2']
    #allocation9 [shape = 'u8[8192]{0}', space=vmem, size = 0x2000, scoped, tag = 'output window, operand 0']
    %8 = vsyncpa [#allocation4], 0
    %9 = vsyncpa [#allocation7], 0
    %s10 = scalar_lea.sflag [#allocation7], 1
    %11 = vsyncpa %s10, 0
    %12 = vsyncpa [#allocation5], 0
    %s13 = scalar_lea.sflag [#allocation5], 1
    %14 = vsyncpa %s13, 0
    loop: start=0, step=1, limit=5
    $region2: #{tpu_custom_call.1} parent=1 // loop_pre_header
      _
    $region3: #{tpu_custom_call.1} parent=1 // loop_header
      %s16 = sphi 0, %s20
      %p17 = scmp.ge.s32.totalorder %s16, 5
      %s23 = sphi 0, %s42
      %s24 = sphi 0, %s38
      %s25 = sphi 0, %s34
      %s26 = sphi 0, %s23
      %s27 = sphi 0, %s24
      %s28 = sphi 0, %s25
      %s29 = sphi 0, %s26
      %s30 = sphi 0, %s27
      %s31 = sphi 0, %s28
      %s47 = sphi 0, %s49
      %s50 = sphi 0, %s47
      %s51 = sphi 0, %s50
      %s67 = sphi 0, %s51
      %s75 = sphi 0, %s77
      %s78 = sphi 0, %s75
      %s79 = sphi 0, %s78
      %s95 = sphi 0, %s79
      %s101 = sphi 0, %s103
      %s104 = sphi 0, %s101
      %s105 = sphi 0, %s104
      %s121 = sphi 0, %s105
      %s129 = sphi 0, %s131
      %s132 = sphi 0, %s129
      %s133 = sphi 0, %s132
      %s149 = sphi 0, %s133
    $region4: #{tpu_custom_call.1} parent=1 // loop_header_branch
      %19 = sbr.rel (%p17) target = $region8
    $region5: #{tpu_custom_call.1} parent=1 // loop_body
      %s21 = ssub.s32 %s16, 1
      %s22 = ssub.s32 %s16, 2
      %s32 = sadd.s32 1, %s25
      %p33 = scmp.ge.s32.totalorder %s32, 1
      %s34 = scalar_select %p33, 0, %s32
      %s35 = sadd.s32 1, %s24
      %s36 = scalar_select %p33, %s35, %s24
      %p37 = scmp.ge.s32.totalorder %s36, 3
      %s38 = scalar_select %p37, 0, %s36
      %s39 = sadd.s32 1, %s23
      %s40 = scalar_select %p37, %s39, %s23
      %p41 = scmp.ge.s32.totalorder %s40, 1
      %s42 = scalar_select %p41, 0, %s40
      %s43 = ssub.s32 %s23, %s42
      %s44 = ssub.s32 %s25, %s34
      %s45 = sor.u32 %s43, %s44
      %p46 = scmp.eq.s32.totalorder %s45, 0
      %s48 = sadd.s32 %s47, 1
      %s49 = scalar_select %p46, %s47, %s48
      %p52 = pneg %p46
      %p53 = scmp.eq.s32.totalorder %s16, 2
      %p54 = por %p52, %p53
      %p55 = scmp.ne.s32.totalorder %s47, %s50
      %p56 = scmp.eq.s32.totalorder %s16, 0
      %p57 = por %p55, %p56
      %p58 = scmp.ne.s32.totalorder %s47, %s50
      %p59 = scmp.eq.s32.totalorder %s21, 2
      %p60 = por %p58, %p59
      %p61 = scmp.ne.s32.totalorder %s50, %s51
      %p62 = scmp.eq.s32.totalorder %s21, 0
      %p63 = por %p61, %p62
      %p64 = scmp.ne.s32.totalorder %s50, %s51
      %p65 = scmp.eq.s32.totalorder %s22, 2
      %p66 = por %p64, %p65
      %p68 = scmp.ne.s32.totalorder %s51, %s67
      %p69 = scmp.eq.s32.totalorder %s22, 0
      %p70 = por %p68, %p69
      %s71 = ssub.s32 %s25, %s34
      %s72 = ssub.s32 %s24, %s38
      %s73 = sor.u32 %s71, %s72
      %p74 = scmp.eq.s32.totalorder %s73, 0
      %s76 = sadd.s32 %s75, 1
      %s77 = scalar_select %p74, %s75, %s76
      %p80 = pneg %p74
      %p81 = scmp.eq.s32.totalorder %s16, 2
      %p82 = por %p80, %p81
      %p83 = scmp.ne.s32.totalorder %s75, %s78
      %p84 = scmp.eq.s32.totalorder %s16, 0
      %p85 = por %p83, %p84
      %p86 = scmp.ne.s32.totalorder %s75, %s78
      %p87 = scmp.eq.s32.totalorder %s21, 2
      %p88 = por %p86, %p87
      %p89 = scmp.ne.s32.totalorder %s78, %s79
      %p90 = scmp.eq.s32.totalorder %s21, 0
      %p91 = por %p89, %p90
      %p92 = scmp.ne.s32.totalorder %s78, %s79
      %p93 = scmp.eq.s32.totalorder %s22, 2
      %p94 = por %p92, %p93
      %p96 = scmp.ne.s32.totalorder %s79, %s95
      %p97 = scmp.eq.s32.totalorder %s22, 0
      %p98 = por %p96, %p97
      %s99 = ssub.s32 %s24, %s38
      %p100 = scmp.eq.s32.totalorder %s99, 0
      %s102 = sadd.s32 %s101, 1
      %s103 = scalar_select %p100, %s101, %s102
      %p106 = pneg %p100
      %p107 = scmp.eq.s32.totalorder %s16, 2
      %p108 = por %p106, %p107
      %p109 = scmp.ne.s32.totalorder %s101, %s104
      %p110 = scmp.eq.s32.totalorder %s16, 0
      %p111 = por %p109, %p110
      %p112 = scmp.ne.s32.totalorder %s101, %s104
      %p113 = scmp.eq.s32.totalorder %s21, 2
      %p114 = por %p112, %p113
      %p115 = scmp.ne.s32.totalorder %s104, %s105
      %p116 = scmp.eq.s32.totalorder %s21, 0
      %p117 = por %p115, %p116
      %p118 = scmp.ne.s32.totalorder %s104, %s105
      %p119 = scmp.eq.s32.totalorder %s22, 2
      %p120 = por %p118, %p119
      %p122 = scmp.ne.s32.totalorder %s105, %s121
      %p123 = scmp.eq.s32.totalorder %s22, 0
      %p124 = por %p122, %p123
      %s125 = ssub.s32 %s23, %s42
      %s126 = ssub.s32 %s24, %s38
      %s127 = sor.u32 %s125, %s126
      %p128 = scmp.eq.s32.totalorder %s127, 0
      %s130 = sadd.s32 %s129, 1
      %s131 = scalar_select %p128, %s129, %s130
      %p134 = pneg %p128
      %p135 = scmp.eq.s32.totalorder %s16, 2
      %p136 = por %p134, %p135
      %p137 = scmp.ne.s32.totalorder %s129, %s132
      %p138 = scmp.eq.s32.totalorder %s16, 0
      %p139 = por %p137, %p138
      %p140 = scmp.ne.s32.totalorder %s129, %s132
      %p141 = scmp.eq.s32.totalorder %s21, 2
      %p142 = por %p140, %p141
      %p143 = scmp.ne.s32.totalorder %s132, %s133
      %p144 = scmp.eq.s32.totalorder %s21, 0
      %p145 = por %p143, %p144
      %p146 = scmp.ne.s32.totalorder %s132, %s133
      %p147 = scmp.eq.s32.totalorder %s22, 2
      %p148 = por %p146, %p147
      %p150 = scmp.ne.s32.totalorder %s133, %s149
      %p151 = scmp.eq.s32.totalorder %s22, 0
      %p152 = por %p150, %p151
      %p153 = scmp.le.s32.totalorder 1, %s16
      %p154 = scmp.lt.s32.totalorder %s16, 4
      %p155 = pnand %p153, %p154
      %p156 = pneg %p155
      // Predicated region
      $region9: #{tpu_custom_call.1} parent=5 // pred_check
        _
      $region10: #{tpu_custom_call.1} parent=5 // pred_check_branch
        %158 = sbr.rel (%p155) target = $region12
      $region11: #{tpu_custom_call.1} parent=5 // pred_region
        %s159 = ssub.s32 %s16, 1
        // Predicated region
        $region13: #{tpu_custom_call.1} parent=11 // pred_check
          %p160 = pneg %p63
        $region14: #{tpu_custom_call.1} parent=11 // pred_check_branch
          %162 = sbr.rel (%p160) target = $region16
        $region15: #{tpu_custom_call.1} parent=11 // pred_region
          %s163 = smul.u32 2, %s26
          %165 = vsyncadd [#allocation4], 0
          %s166 = sadd.s32 %s28, %s163
          %s167 = smul.addr %s166, 4
          %s168 = scalar_lea.hbm %s0, %s167
          %s169 = sshll.u32 %s168, 4
          %s170 = int_to_ptr.hbm [resolvable:$true] %s169
          %s171 = sshll.u32 [#allocation3], 4
          %s172 = int_to_ptr.vmem [resolvable:$true] %s171
          %177 = dma.hbm_to_vmem [thread:$0]  %s170, 128, %s172, [#allocation4], 64, 64, 4
        $region16: #{tpu_custom_call.1} parent=11 // pred_fallthru
          _
      $region12: #{tpu_custom_call.1} parent=5 // pred_fallthru
        _
      %p178 = scmp.lt.s32.totalorder %s16, 3
      // Predicated region
      $region17: #{tpu_custom_call.1} parent=5 // pred_check
        %p179 = pneg %p178
      $region18: #{tpu_custom_call.1} parent=5 // pred_check_branch
        %181 = sbr.rel (%p179) target = $region20
      $region19: #{tpu_custom_call.1} parent=5 // pred_region
        // Predicated region
        $region21: #{tpu_custom_call.1} parent=19 // pred_check
          %p182 = pneg %p85
        $region22: #{tpu_custom_call.1} parent=19 // pred_check_branch
          %184 = sbr.rel (%p182) target = $region24
        $region23: #{tpu_custom_call.1} parent=19 // pred_region
          %s185 = sand.u32 %s16, 1
          %s186 = scalar_lea.sflag [#allocation7], %s185
          %s187 = sand.u32 %s75, 1
          %s188 = smul.addr %s187, 64
          %s189 = scalar_lea.vmem [#allocation6], %s188
          %s190 = smul.u32 16, %s25
          %192 = vsyncadd %s186, 0
          %s193 = smul.addr %s190, 3
          %s194 = sadd.s32 %s24, %s193
          %s195 = smul.addr %s194, 4
          %s196 = scalar_lea.hbm %s1, %s195
          %s197 = sshll.u32 %s196, 4
          %s198 = int_to_ptr.hbm [resolvable:$true] %s197
          %s199 = sshll.u32 %s189, 4
          %s200 = int_to_ptr.vmem [resolvable:$true] %s199
          %205 = dma.hbm_to_vmem [thread:$0]  %s198, 1024, %s200, %s186, 192, 64, 4
        $region24: #{tpu_custom_call.1} parent=19 // pred_fallthru
          _
        // Predicated region
        $region25: #{tpu_custom_call.1} parent=19 // pred_check
          %p206 = pneg %p111
        $region26: #{tpu_custom_call.1} parent=19 // pred_check_branch
          %208 = sbr.rel (%p206) target = $region28
        $region27: #{tpu_custom_call.1} parent=19 // pred_region
          %s209 = sand.u32 %s16, 1
          %s210 = scalar_lea.sflag [#allocation7], %s209
          %s211 = sand.u32 %s101, 1
          %s212 = scalar_lea.vmem [#allocation8], %s211
          %214 = vsyncadd %s210, 0
          %s215 = scalar_lea.hbm %s2, %s24
          %s217 = sshll.u32 %s215, 4
          %s218 = int_to_ptr.hbm [resolvable:$true] %s217
          %s219 = sshll.u32 %s212, 4
          %s220 = int_to_ptr.vmem [resolvable:$true] %s219
          %222 = dma.hbm_to_vmem [thread:$0]  %s218, 16, %s220, %s210
        $region28: #{tpu_custom_call.1} parent=19 // pred_fallthru
          _
      $region20: #{tpu_custom_call.1} parent=5 // pred_fallthru
        _
      %p223 = scmp.le.s32.totalorder 1, %s16
      %p224 = scmp.lt.s32.totalorder %s16, 4
      %p225 = pnand %p223, %p224
      %p226 = pneg %p225
      // Predicated region
      $region29: #{tpu_custom_call.1} parent=5 // pred_check
        _
      $region30: #{tpu_custom_call.1} parent=5 // pred_check_branch
        %228 = sbr.rel (%p225) target = $region32
      $region31: #{tpu_custom_call.1} parent=5 // pred_region
        %s229 = ssub.s32 %s16, 1
        // Predicated region
        $region33: #{tpu_custom_call.1} parent=31 // pred_check
          %p230 = pneg %p63
        $region34: #{tpu_custom_call.1} parent=31 // pred_check_branch
          %232 = sbr.rel (%p230) target = $region36
        $region35: #{tpu_custom_call.1} parent=31 // pred_region
          %234 = dma.done [#allocation4], 128
        $region36: #{tpu_custom_call.1} parent=31 // pred_fallthru
          _
        %s235 = sand.u32 %s21, 1
        %s236 = scalar_lea.sflag [#allocation7], %s235
        %s237 = sand.u32 %s78, 1
        %s238 = smul.addr %s237, 64
        %s239 = scalar_lea.vmem [#allocation6], %s238
        // Predicated region
        $region37: #{tpu_custom_call.1} parent=31 // pred_check
          %p240 = pneg %p91
        $region38: #{tpu_custom_call.1} parent=31 // pred_check_branch
          %242 = sbr.rel (%p240) target = $region40
        $region39: #{tpu_custom_call.1} parent=31 // pred_region
          %244 = dma.done %s236, 1024
        $region40: #{tpu_custom_call.1} parent=31 // pred_fallthru
          _
        %s245 = sand.u32 %s21, 1
        %s246 = scalar_lea.sflag [#allocation7], %s245
        %s247 = sand.u32 %s104, 1
        %s248 = scalar_lea.vmem [#allocation8], %s247
        // Predicated region
        $region41: #{tpu_custom_call.1} parent=31 // pred_check
          %p249 = pneg %p117
        $region42: #{tpu_custom_call.1} parent=31 // pred_check_branch
          %251 = sbr.rel (%p249) target = $region44
        $region43: #{tpu_custom_call.1} parent=31 // pred_region
          %253 = dma.done %s246, 16
        $region44: #{tpu_custom_call.1} parent=31 // pred_fallthru
          _
        %p254 = pneg %p63
        %p255 = pneg %p60
        %s256 = sand.u32 %s21, 1
        %s257 = scalar_lea.sflag [#allocation7], %s256
        %s258 = sand.u32 %s78, 1
        %s259 = smul.addr %s258, 64
        %s260 = scalar_lea.vmem [#allocation6], %s259
        %p261 = pneg %p91
        %p262 = pneg %p88
        %s263 = sand.u32 %s21, 1
        %s264 = scalar_lea.sflag [#allocation7], %s263
        %s265 = sand.u32 %s104, 1
        %s266 = scalar_lea.vmem [#allocation8], %s265
        %p267 = pneg %p117
        %p268 = pneg %p114
        %p269 = pneg %p145
        %p270 = pneg %p142
        %s271 = sand.u32 %s132, 1
        %s272 = scalar_lea.sflag [#allocation5], %s271
        %s273 = sand.u32 %s132, 1
        %s274 = smul.addr %s273, 8
        %s275 = scalar_lea.vmem [#allocation9], %s274
        %s276 = smul.u32 2, %s26
        %s277 = smul.u32 16, %s28
        %s278 = smul.u32 2, %s26
        %p279 = scmp.eq.s32.totalorder %s28, 0
        // Predicated region
        $region45: #{tpu_custom_call.1} parent=31 // pred_check
          %p280 = pneg %p279
        $region46: #{tpu_custom_call.1} parent=31 // pred_check_branch
          %282 = sbr.rel (%p280) target = $region48
        $region47: #{tpu_custom_call.1} parent=31 // pred_region
          %283 = vst [vmem:[#allocation2] sm:$0xff] 0.0
          %284 = vst [vmem:[#allocation2 + $0x8] sm:$0xff] 0.0
        $region48: #{tpu_custom_call.1} parent=31 // pred_fallthru
          _
        %v285 = vld [vmem:[#allocation2] sm:$0xff]
        %v286 = vld [vmem:[#allocation2 + $0x8] sm:$0xff]
        %v287 = vld [vmem:[#allocation3] sm:$0xf]
        %v288 = vld [vmem:[#allocation3 + $0x4] sm:$0xf]
        %v289 = vld [vmem:[%s239] sm:$0xf]
        %v290 = vld [vmem:[%s239 + $0x4] sm:$0xf]
        %v291 = vld [vmem:[%s239 + $0x8] sm:$0xf]
        %v292 = vld [vmem:[%s239 + $0xc] sm:$0xf]
        %v293 = vld [vmem:[%s239 + $0x10] sm:$0xf]
        %v294 = vld [vmem:[%s239 + $0x14] sm:$0xf]
        %v295 = vld [vmem:[%s239 + $0x18] sm:$0xf]
        %v296 = vld [vmem:[%s239 + $0x1c] sm:$0xf]
        %v297 = vld [vmem:[%s239 + $0x20] sm:$0xf]
        %v298 = vld [vmem:[%s239 + $0x24] sm:$0xf]
        %v299 = vld [vmem:[%s239 + $0x28] sm:$0xf]
        %v300 = vld [vmem:[%s239 + $0x2c] sm:$0xf]
        %v301 = vld [vmem:[%s239 + $0x30] sm:$0xf]
        %v302 = vld [vmem:[%s239 + $0x34] sm:$0xf]
        %v303 = vld [vmem:[%s239 + $0x38] sm:$0xf]
        %v304 = vld [vmem:[%s239 + $0x3c] sm:$0xf]
        %v307 = vunpack.c.l.b16 %v287
        %v308 = vunpack.c.l.b16 %v288
        %v309 = vpack.c.b16 %v308, %v307
        %v327 = vunpack.c.l.b16 %v289
        %v328 = vunpack.c.l.b16 %v290
        %v329 = vunpack.c.l.b16 %v291
        %v330 = vunpack.c.l.b16 %v292
        %v331 = vunpack.c.l.b16 %v293
        %v332 = vunpack.c.l.b16 %v294
        %v333 = vunpack.c.l.b16 %v295
        %v334 = vunpack.c.l.b16 %v296
        %v335 = vunpack.c.l.b16 %v297
        %v336 = vunpack.c.l.b16 %v298
        %v337 = vunpack.c.l.b16 %v299
        %v338 = vunpack.c.l.b16 %v300
        %v339 = vunpack.c.l.b16 %v301
        %v340 = vunpack.c.l.b16 %v302
        %v341 = vunpack.c.l.b16 %v303
        %v342 = vunpack.c.l.b16 %v304
        %v343 = vpack.c.b16 %v328, %v327
        %v344 = vpack.c.b16 %v330, %v329
        %v345 = vpack.c.b16 %v332, %v331
        %v346 = vpack.c.b16 %v334, %v333
        %v347 = vpack.c.b16 %v336, %v335
        %v348 = vpack.c.b16 %v338, %v337
        %v349 = vpack.c.b16 %v340, %v339
        %v350 = vpack.c.b16 %v342, %v341
        %359 = vmatpush.bf16.msra.mxu0 %v350
        %360 = vmatpush.bf16.msra.mxu0 %v349
        %361 = vmatpush.bf16.msra.mxu0 %v348
        %362 = vmatpush.bf16.msra.mxu0 %v347
        %363 = vmatpush.bf16.msra.mxu0 %v346
        %364 = vmatpush.bf16.msra.mxu0 %v345
        %365 = vmatpush.bf16.msra.mxu0 %v344
        %366 = vmatpush.bf16.msra.mxu0 %v343
        %367 = vmatmul.bf16.gmra.mxu0 %v309
        %v368 = vpop.f32.mrf.mxu0
        %v369 = vadd.f32 0.0, %v368
        %v370 = vpop.f32.mrf.mxu0
        %v371 = vadd.f32 0.0, %v370
        %372 = vdwg.mxu0
        %v373 = vadd.f32 %v285, %v369
        %v374 = vadd.f32 %v286, %v371
        %375 = vst [vmem:[#allocation2] sm:$0xff] %v373
        %376 = vst [vmem:[#allocation2 + $0x8] sm:$0xff] %v374
        // Predicated region
        $region49: #{tpu_custom_call.1} parent=31 // pred_check
          %p377 = pneg %p279
        $region50: #{tpu_custom_call.1} parent=31 // pred_check_branch
          %379 = sbr.rel (%p377) target = $region52
        $region51: #{tpu_custom_call.1} parent=31 // pred_region
          %v380 = vld [vmem:[#allocation2] sm:$0xff]
          %v381 = vld [vmem:[#allocation2 + $0x8] sm:$0xff]
          %v382 = vld [vmem:[%s248] sm:$0x1]
          %v384 = vperm.slane %v382, 0
          %v386 = vadd.f32 %v380, %v384
          %v387 = vadd.f32 %v381, %v384
          %v388 = vpack.c.bf16 %v386, %v386
          %v389 = vpack.c.bf16 %v387, %v387
          %390 = vst [vmem:[%s275] sm:$0xf] %v388
          %391 = vst [vmem:[%s275 + $0x4] sm:$0xf] %v389
        $region52: #{tpu_custom_call.1} parent=31 // pred_fallthru
          _
        %s392 = sand.u32 %s132, 1
        %s393 = scalar_lea.sflag [#allocation5], %s392
        %s394 = sand.u32 %s132, 1
        %s395 = smul.addr %s394, 8
        %s396 = scalar_lea.vmem [#allocation9], %s395
        // Predicated region
        $region53: #{tpu_custom_call.1} parent=31 // pred_check
          %p397 = pneg %p142
        $region54: #{tpu_custom_call.1} parent=31 // pred_check_branch
          %399 = sbr.rel (%p397) target = $region56
        $region55: #{tpu_custom_call.1} parent=31 // pred_region
          %s400 = smul.u32 2, %s26
          %402 = vsyncadd %s393, 0
          %s403 = smul.addr %s400, 3
          %s404 = sadd.s32 %s27, %s403
          %s405 = smul.addr %s404, 4
          %s406 = scalar_lea.hbm %s3, %s405
          %s407 = sshll.u32 %s396, 4
          %s408 = int_to_ptr.vmem [resolvable:$true] %s407
          %s409 = sshll.u32 %s406, 4
          %s410 = int_to_ptr.hbm [resolvable:$true] %s409
          %415 = dma.vmem_to_hbm [thread:$0]  %s408, 128, %s410, %s393, 64, 192, 4
        $region56: #{tpu_custom_call.1} parent=31 // pred_fallthru
          _
      $region32: #{tpu_custom_call.1} parent=5 // pred_fallthru
        _
      %p416 = scmp.le.s32.totalorder 2, %s16
      // Predicated region
      $region57: #{tpu_custom_call.1} parent=5 // pred_check
        %p417 = pneg %p416
      $region58: #{tpu_custom_call.1} parent=5 // pred_check_branch
        %419 = sbr.rel (%p417) target = $region60
      $region59: #{tpu_custom_call.1} parent=5 // pred_region
        %s420 = ssub.s32 %s16, 2
        // Predicated region
        $region61: #{tpu_custom_call.1} parent=59 // pred_check
          %p421 = pneg %p148
        $region62: #{tpu_custom_call.1} parent=59 // pred_check_branch
          %423 = sbr.rel (%p421) target = $region64
        $region63: #{tpu_custom_call.1} parent=59 // pred_region
          %s424 = sand.u32 %s133, 1
          %s425 = scalar_lea.sflag [#allocation5], %s424
          %s426 = sand.u32 %s133, 1
          %s427 = smul.addr %s426, 8
          %s428 = scalar_lea.vmem [#allocation9], %s427
          %430 = dma.done %s425, 128
        $region64: #{tpu_custom_call.1} parent=59 // pred_fallthru
          _
      $region60: #{tpu_custom_call.1} parent=5 // pred_fallthru
        _
    $region6: #{tpu_custom_call.1} parent=1 // loop_footer
      %s20 = sadd.s32 1, %s16
    $region7: #{tpu_custom_call.1} parent=1 // loop_footer_branch
      %15 = sbr.rel target = $region3
    $region8: #{tpu_custom_call.1} parent=1 // loop_exit
      _
    %431 = vsyncpa [#allocation4], 1
    %s432 = scalar_lea.sflag [#allocation4], 1
    %433 = vsyncpa %s432, 1
    %434 = vsyncpa [#allocation7], 1
    %s435 = scalar_lea.sflag [#allocation7], 1
    %436 = vsyncpa %s435, 1
    %437 = vsyncpa [#allocation5], 1
    %s438 = scalar_lea.sflag [#allocation5], 1
    %439 = vsyncpa %s438, 1

</llo_original>
